<compile_context>
chip_gen: v7x
topology: tpu7x:2x2x1
jax: 0.10.0
libtpu: 0.0.40
codegen_flags: <defaults>
</compile_context>

<pallas_src>
import functools

import jax
import jax.numpy as jnp
from jax.experimental import pallas as pl
from jax.experimental.pallas import tpu as pltpu


def _l2_recon_kernel(x_ref, y_ref, out_ref, *, s_total, ts, nc_full, ragged):
    """One grid step processes a (TB, TS, 128) tile of `input` and `output`.

    x_ref   : VMEM (TB, TS, 128)  native-dtype slice of `input`
    y_ref   : VMEM (TB, TS, 128)  native-dtype slice of `output`
    out_ref : VMEM (TB, 1, 128)   f32 per-sample partial SSE, lane-dense,
                                  resident across the chunk (arbitrary) axis.
    """
    p = pl.program_id(0)
    c = pl.program_id(2)
    nc_p = pl.num_programs(2)
    global_c = p * nc_p + c          # chunk index in the un-split chunk space

    @pl.when(c == 0)
    def _():
        out_ref[...] = jnp.zeros_like(out_ref)

    def accumulate(masked):
        d = x_ref[...].astype(jnp.float32) - y_ref[...].astype(jnp.float32)
        if masked:
            row = jax.lax.broadcasted_iota(jnp.int32, d.shape, 1) + global_c * ts
            d = jnp.where(row < s_total, d, 0.0)
        out_ref[...] += jnp.sum(d * d, axis=1, keepdims=True)

    if ragged:
        # Gate the iota/compare/select mask to chunks that can actually spill
        # past the true row count S; all earlier chunks run unmasked.
        @pl.when(global_c < nc_full)
        def _():
            accumulate(masked=False)

        @pl.when(global_c >= nc_full)
        def _():
            accumulate(masked=True)
    else:
        accumulate(masked=False)


def l2_recon_loss(input_x, output_y, weights, *, block_bytes=4 << 20):
    assert input_x.shape == output_y.shape
    B = int(input_x.shape[0])
    F = 1
    for s in input_x.shape[1:]:
        F *= int(s)

    xf = input_x.reshape(B, F)
    yf = output_y.reshape(B, F)

    # TODO(synk): for F % 128 != 0 this pad materializes full copies of both
    # inputs (~3x HBM traffic); a zero-copy path needs manual-DMA ragged tiles.
    # It is a no-op for the common F % 128 == 0 case.
    pad = (-F) % 128
    if pad:
        xf = jnp.pad(xf, ((0, 0), (0, pad)))
        yf = jnp.pad(yf, ((0, 0), (0, pad)))
    S = (F + pad) // 128

    x3 = xf.reshape(B, S, 128)
    y3 = yf.reshape(B, S, 128)

    itemsize = jnp.dtype(x3.dtype).itemsize
    # ~4 MiB per input block => <=16 MiB double-buffered for both inputs,
    # inside the explicit 48 MiB scoped-VMEM limit on every generation
    # (v7x: 64 MiB physical, v5e/v6e: 128 MiB physical).
    target_rows = max(8, block_bytes // (128 * itemsize))

    if S > target_rows:
        ts = (target_rows // 8) * 8        # chunk the feature rows
        tb = 1
    else:
        ts = S                             # whole sample; pack samples per block
        tb = min(B, max(1, target_rows // max(S, 1)))

    nb = pl.cdiv(B, tb)                    # no divisor-of-B constraint
    nc = pl.cdiv(S, ts)

    # Guarantee a >=2-wide parallel grid axis (v7x has two TensorCores): if the
    # batch axis alone can't provide it, split the chunk axis in two.
    P = 2 if (nb < 2 and nc >= 2) else 1
    nc_p = pl.cdiv(nc, P)

    nc_full = S // ts                      # chunks guaranteed fully in-bounds
    ragged = (P * nc_p * ts) > S           # can any chunk spill past row S?

    kernel = functools.partial(_l2_recon_kernel, s_total=S, ts=ts,
                               nc_full=nc_full, ragged=ragged)

    cost = pl.CostEstimate(
        flops=3 * B * F,
        transcendentals=0,
        bytes_accessed=2 * B * (F + pad) * itemsize + nb * tb * P * 128 * 4,
    )

    # Chunk block index, clamped so fully-over-range chunks (only possible on
    # the size-2 parallel split with an odd chunk count) re-read the last valid
    # chunk; the kernel zero-masks them via the unclamped global chunk index.
    def in_map(p, b, c):
        return (b, jnp.minimum(p * nc_p + c, nc - 1), 0)

    partials = pl.pallas_call(
        kernel,
        out_shape=jax.ShapeDtypeStruct((nb * tb, P, 128), jnp.float32),
        grid=(P, nb, nc_p),
        in_specs=[
            pl.BlockSpec((tb, ts, 128), in_map),   # input
            pl.BlockSpec((tb, ts, 128), in_map),   # output
        ],
        out_specs=pl.BlockSpec((tb, 1, 128), lambda p, b, c: (b, p, 0)),
        compiler_params=pltpu.CompilerParams(
            dimension_semantics=("parallel", "parallel", "arbitrary"),
            vmem_limit_bytes=48 << 20),
        cost_estimate=cost,
    )(x3, y3)

    # Tiny final reduce + weighting + scaling in the wrapper (B x P x 128 f32).
    sse_per_sample = jnp.sum(partials[:B], axis=(1, 2))              # (B,)
    w = weights.astype(jnp.float32)
    # sum_i w_i * (sse_i / F)  /  B
    return jnp.sum(w * sse_per_sample) / (float(F) * float(B))


def _reference(x, y, w):
    per_sample_mse = jnp.mean(
        (x.astype(jnp.float32) - y.astype(jnp.float32)) ** 2,
        axis=tuple(range(1, x.ndim)))
    return jnp.sum(w.astype(jnp.float32) * per_sample_mse) / x.shape[0]


if __name__ == "__main__":
    key = jax.random.PRNGKey(0)
    k1, k2, k3, k4, k5, k6 = jax.random.split(key, 6)

    # Case 1: packed small-sample path (default block size).
    B, C, H, W = 2, 4, 16, 16
    x = jax.random.normal(k1, (B, C, H, W), dtype=jnp.float32)   # "input"
    y = jax.random.normal(k2, (B, C, H, W), dtype=jnp.float32)   # "output"
    w = jax.random.uniform(k3, (B,), dtype=jnp.float32)          # "weights"

    loss = jax.block_until_ready(l2_recon_loss(x, y, w))
    ref = _reference(x, y, w)
    assert jnp.allclose(loss, ref, rtol=1e-4, atol=1e-6), (loss, ref)

    # Case 2: chunked path with batch-too-narrow -> 2-wide parallel S-split and
    # a ragged tail chunk (tiny block_bytes to exercise it at small shapes).
    B2, F2 = 1, 12800                                            # S = 100 rows
    x2 = jax.random.normal(k4, (B2, F2), dtype=jnp.float32)
    y2 = jax.random.normal(k5, (B2, F2), dtype=jnp.float32)
    w2 = jax.random.uniform(k6, (B2,), dtype=jnp.float32)

    loss2 = jax.block_until_ready(l2_recon_loss(x2, y2, w2, block_bytes=16 * 128 * 4))
    ref2 = _reference(x2, y2, w2)
    assert jnp.allclose(loss2, ref2, rtol=1e-4, atol=1e-6), (loss2, ref2)

    print("KERNEL_OK")
</pallas_src>

<mosaic_0001>
module attributes {stable_mosaic.version = 11 : i64} {
  func.func @_l2_recon_kernel(%arg0: i32, %arg1: i32, %arg2: i32, %arg3: memref<2x8x128xf32, #tpu.memory_space<vmem>>, %arg4: memref<2x8x128xf32, #tpu.memory_space<vmem>>, %arg5: memref<2x1x128xf32, #tpu.memory_space<vmem>>) attributes {dimension_semantics = [#tpu.dimension_semantics<parallel>, #tpu.dimension_semantics<parallel>, #tpu.dimension_semantics<arbitrary>], iteration_bounds = array<i64: 1, 1, 1>, scalar_prefetch = 0 : i64, scratch_operands = 0 : i64, tpu.core_type = #tpu.core_type<tc>, window_params = [{transform_indices = @transform_0, window_bounds = array<i64: 2, 8, 128>}, {transform_indices = @transform_1, window_bounds = array<i64: 2, 8, 128>}, {transform_indices = @transform_2, window_bounds = array<i64: 2, 1, 128>}]} {
    %c0_i32 = arith.constant 0 : i32
    %0 = arith.cmpi eq, %arg2, %c0_i32 : i32
    %1 = arith.extui %0 : i1 to i32
    %c0_i32_0 = arith.constant 0 : i32
    %2 = arith.cmpi ne, %1, %c0_i32_0 : i32
    scf.if %2 {
      %cst_12 = arith.constant 0.000000e+00 : f32
      %12 = vector.broadcast %cst_12 : f32 to vector<2x1x128xf32>
      %c0_13 = arith.constant 0 : index
      %c0_14 = arith.constant 0 : index
      %c0_15 = arith.constant 0 : index
      %13 = vector.load %arg5[%c0_13, %c0_14, %c0_15] : memref<2x1x128xf32, #tpu.memory_space<vmem>>, vector<2x1x128xf32>
      tpu.vector_store %arg5[%c0_13, %c0_14, %c0_15], %12 {strides = array<i32>} : memref<2x1x128xf32, #tpu.memory_space<vmem>>, vector<2x1x128xf32>,
    } else {
    }
    %c0 = arith.constant 0 : index
    %c0_1 = arith.constant 0 : index
    %c0_2 = arith.constant 0 : index
    %3 = vector.load %arg3[%c0, %c0_1, %c0_2] : memref<2x8x128xf32, #tpu.memory_space<vmem>>, vector<2x8x128xf32>
    %c0_3 = arith.constant 0 : index
    %c0_4 = arith.constant 0 : index
    %c0_5 = arith.constant 0 : index
    %4 = vector.load %arg4[%c0_3, %c0_4, %c0_5] : memref<2x8x128xf32, #tpu.memory_space<vmem>>, vector<2x8x128xf32>
    %5 = arith.subf %3, %4 : vector<2x8x128xf32>
    %c0_6 = arith.constant 0 : index
    %c0_7 = arith.constant 0 : index
    %c0_8 = arith.constant 0 : index
    %6 = vector.load %arg5[%c0_6, %c0_7, %c0_8] : memref<2x1x128xf32, #tpu.memory_space<vmem>>, vector<2x1x128xf32>
    %7 = arith.mulf %5, %5 : vector<2x8x128xf32>
    %cst = arith.constant dense<0.000000e+00> : vector<2x128xf32>
    %8 = vector.multi_reduction <add>, %7, %cst [1] : vector<2x8x128xf32> to vector<2x128xf32>
    %9 = vector.shape_cast %8 : vector<2x128xf32> to vector<2x1x128xf32>
    %10 = arith.addf %6, %9 : vector<2x1x128xf32>
    %c0_9 = arith.constant 0 : index
    %c0_10 = arith.constant 0 : index
    %c0_11 = arith.constant 0 : index
    %11 = vector.load %arg5[%c0_9, %c0_10, %c0_11] : memref<2x1x128xf32, #tpu.memory_space<vmem>>, vector<2x1x128xf32>
    tpu.vector_store %arg5[%c0_9, %c0_10, %c0_11], %10 {strides = array<i32>} : memref<2x1x128xf32, #tpu.memory_space<vmem>>, vector<2x1x128xf32>,
    return
  }
  func.func @transform_0(%arg0: i32, %arg1: i32, %arg2: i32) -> (i32, i32, i32) {
    %c1_i32 = arith.constant 1 : i32
    %0 = arith.muli %arg0, %c1_i32 : i32
    %1 = arith.addi %0, %arg2 : i32
    %c0_i32 = arith.constant 0 : i32
    %2 = arith.minsi %1, %c0_i32 : i32
    %c0_i32_0 = arith.constant 0 : i32
    %c0_i32_1 = arith.constant 0 : i32
    return %arg1, %2, %c0_i32_0 : i32, i32, i32
  }
  func.func @transform_1(%arg0: i32, %arg1: i32, %arg2: i32) -> (i32, i32, i32) {
    %c1_i32 = arith.constant 1 : i32
    %0 = arith.muli %arg0, %c1_i32 : i32
    %1 = arith.addi %0, %arg2 : i32
    %c0_i32 = arith.constant 0 : i32
    %2 = arith.minsi %1, %c0_i32 : i32
    %c0_i32_0 = arith.constant 0 : i32
    %c0_i32_1 = arith.constant 0 : i32
    return %arg1, %2, %c0_i32_0 : i32, i32, i32
  }
  func.func @transform_2(%arg0: i32, %arg1: i32, %arg2: i32) -> (i32, i32, i32) {
    %c0_i32 = arith.constant 0 : i32
    %c0_i32_0 = arith.constant 0 : i32
    return %arg1, %arg0, %c0_i32 : i32, i32, i32
  }
}

</mosaic_0001>

<llo_original>
// kernel: tpu_custom_call.1
$region0: #{tpu_custom_call.1}
  #allocation0 [shape = 'u32[]', space=smem, size = 0x4, offset = 0x4, fixed_abs, tag = 'smem constant byte address 0x4 - core index']
  #allocation1 [shape = 'u32[144,128]{1,0:T(1,128)}', space=vmem, size = 0x12000, scoped, tag = 'internal scratch']
  %s0 = inlined_call_operand.hbm [shape: f32[2,8,128], index: 0, kind: input, shape index: {}]
  %s1 = inlined_call_operand.hbm [shape: f32[2,8,128], index: 1, kind: input, shape index: {}]
  %s2 = inlined_call_operand.hbm [shape: f32[2,1,128], index: 2, kind: output, shape index: {}]
  %s3 = sld [smem:[#allocation0]]
  $region30: #{tpu_custom_call.1} parent=0
    _
  %s5 = ssub.s32 1, %s3
  %s6 = scalar_select 0, %s5, %s3
  $region1: #{tpu_custom_call.1} parent=0
    #allocation2 [shape = 'u8[8192]{0}', space=vmem, size = 0x2000, scoped, tag = 'input window, operand 0, single buffered']
    #allocation3 [shape = 's32[1]{0}', space=sflag, size = 0x4, scoped, tag = 'scoped memory for tpu_custom_call.1']
    #allocation4 [shape = 's32[1]{0}', space=sflag, size = 0x4, scoped, tag = 'scoped memory for tpu_custom_call.1']
    #allocation5 [shape = 'u8[8192]{0}', space=vmem, size = 0x2000, scoped, tag = 'input window, operand 1, single buffered']
    #allocation6 [shape = 's32[1]{0}', space=sflag, size = 0x4, scoped, tag = 'scoped memory for tpu_custom_call.1']
    #allocation7 [shape = 'u8[1024]{0}', space=vmem, size = 0x400, scoped, tag = 'output window, operand 0, single buffered']
    %7 = vsyncpa [#allocation3], 0
    %8 = vsyncpa [#allocation6], 0
    %9 = vsyncpa [#allocation4], 0
    // Predicated region
    $region2: #{tpu_custom_call.1} parent=1 // pred_check
      _
    $region3: #{tpu_custom_call.1} parent=1 // pred_check_branch
      %11 = sbr.rel (0) target = $region5
    $region4: #{tpu_custom_call.1} parent=1 // pred_region
      %s12 = sadd.s32 0, 0
      %p13 = scmp.lt.s32.totalorder %s12, 0
      %s14 = scalar_select %p13, %s12, 0
      %s16 = ssub.s32 256, 256
      %17 = vsyncadd [#allocation3], %s16
      %s18 = smul.addr %s14, 128
      %s19 = scalar_lea.hbm %s0, %s18
      %s20 = sshll.u32 [#allocation2], 4
      %s21 = int_to_ptr.vmem [resolvable:$true] %s20
      %26 = dma.hbm_to_vmem [thread:$0]  %s19, 256, %s21, [#allocation3], 128, 128, 8
    $region5: #{tpu_custom_call.1} parent=1 // pred_fallthru
      _
    // Predicated region
    $region6: #{tpu_custom_call.1} parent=1 // pred_check
      _
    $region7: #{tpu_custom_call.1} parent=1 // pred_check_branch
      %28 = sbr.rel (0) target = $region9
    $region8: #{tpu_custom_call.1} parent=1 // pred_region
      %s29 = sadd.s32 0, 0
      %p30 = scmp.lt.s32.totalorder %s29, 0
      %s31 = scalar_select %p30, %s29, 0
      %s33 = ssub.s32 256, 256
      %34 = vsyncadd [#allocation6], %s33
      %s35 = smul.addr %s31, 128
      %s36 = scalar_lea.hbm %s1, %s35
      %s37 = sshll.u32 [#allocation5], 4
      %s38 = int_to_ptr.vmem [resolvable:$true] %s37
      %43 = dma.hbm_to_vmem [thread:$0]  %s36, 256, %s38, [#allocation6], 128, 128, 8
    $region9: #{tpu_custom_call.1} parent=1 // pred_fallthru
      _
    // Predicated region
    $region10: #{tpu_custom_call.1} parent=1 // pred_check
      _
    $region11: #{tpu_custom_call.1} parent=1 // pred_check_branch
      %45 = sbr.rel (0) target = $region13
    $region12: #{tpu_custom_call.1} parent=1 // pred_region
      %46 = dma.done [#allocation3], 256
    $region13: #{tpu_custom_call.1} parent=1 // pred_fallthru
      _
    // Predicated region
    $region14: #{tpu_custom_call.1} parent=1 // pred_check
      _
    $region15: #{tpu_custom_call.1} parent=1 // pred_check_branch
      %48 = sbr.rel (0) target = $region17
    $region16: #{tpu_custom_call.1} parent=1 // pred_region
      %49 = dma.done [#allocation6], 256
    $region17: #{tpu_custom_call.1} parent=1 // pred_fallthru
      _
    %s50 = sadd.s32 0, 0
    %p51 = scmp.lt.s32.totalorder %s50, 0
    %s52 = scalar_select %p51, %s50, 0
    %s53 = sadd.s32 0, 0
    %p54 = scmp.lt.s32.totalorder %s53, 0
    %s55 = scalar_select %p54, %s53, 0
    %p56 = scmp.eq.s32.totalorder 0, 0
    // Predicated region
    $region18: #{tpu_custom_call.1} parent=1 // pred_check
      %p57 = pneg %p56
    $region19: #{tpu_custom_call.1} parent=1 // pred_check_branch
      %59 = sbr.rel (%p57) target = $region21
    $region20: #{tpu_custom_call.1} parent=1 // pred_region
      %60 = vst [vmem:[#allocation7] sm:$0x1] 0.0
      %61 = vst [vmem:[#allocation7 + $0x1] sm:$0x1] 0.0
    $region21: #{tpu_custom_call.1} parent=1 // pred_fallthru
      _
    %v62 = vld [vmem:[#allocation2] sm:$0xff]
    %v63 = vld [vmem:[#allocation2 + $0x8] sm:$0xff]
    %v64 = vld [vmem:[#allocation5] sm:$0xff]
    %v65 = vld [vmem:[#allocation5 + $0x8] sm:$0xff]
    %v66 = vsub.f32 %v62, %v64
    %v67 = vsub.f32 %v63, %v65
    %v68 = vld [vmem:[#allocation7] sm:$0x1]
    %v69 = vld [vmem:[#allocation7 + $0x1] sm:$0x1]
    %v70 = vmul.f32 %v66, %v66
    %v71 = vmul.f32 %v67, %v67
    %v72 = vrot.slane %v70, 4
    %v73 = vadd.f32 %v70, %v72
    %v74 = vrot.slane %v73, 2
    %v75 = vadd.f32 %v73, %v74
    %v76 = vrot.slane %v75, 1
    %v77 = vadd.f32 %v75, %v76
    %v78 = vrot.slane %v71, 4
    %v79 = vadd.f32 %v71, %v78
    %v80 = vrot.slane %v79, 2
    %v81 = vadd.f32 %v79, %v80
    %v82 = vrot.slane %v81, 1
    %v83 = vadd.f32 %v81, %v82
    %v84 = vadd.f32 %v68, %v77
    %v85 = vadd.f32 %v69, %v83
    %86 = vst [vmem:[#allocation7] sm:$0x1] %v84
    %87 = vst [vmem:[#allocation7 + $0x1] sm:$0x1] %v85
    // Predicated region
    $region22: #{tpu_custom_call.1} parent=1 // pred_check
      _
    $region23: #{tpu_custom_call.1} parent=1 // pred_check_branch
      %89 = sbr.rel (0) target = $region25
    $region24: #{tpu_custom_call.1} parent=1 // pred_region
      %s91 = ssub.s32 32, 32
      %92 = vsyncadd [#allocation4], %s91
      %s93 = sshll.u32 [#allocation7], 4
      %s94 = int_to_ptr.vmem [resolvable:$true] %s93
      %99 = dma.vmem_to_hbm [thread:$0]  %s94, 32, %s2, [#allocation4], 16, 16, 1
    $region25: #{tpu_custom_call.1} parent=1 // pred_fallthru
      _
    // Predicated region
    $region26: #{tpu_custom_call.1} parent=1 // pred_check
      _
    $region27: #{tpu_custom_call.1} parent=1 // pred_check_branch
      %101 = sbr.rel (0) target = $region29
    $region28: #{tpu_custom_call.1} parent=1 // pred_region
      %102 = dma.done [#allocation4], 32
    $region29: #{tpu_custom_call.1} parent=1 // pred_fallthru
      _
    %103 = vsyncpa [#allocation3], 1
    %104 = vsyncpa [#allocation6], 1
    %105 = vsyncpa [#allocation4], 1

</llo_original>
